<compile_context>
chip_gen: v5e
topology: v5e:2x2
jax: 0.10.0
libtpu: 0.0.40
codegen_flags: <defaults>
</compile_context>

<pallas_src>
import functools

import jax
import jax.numpy as jnp
from jax import lax
from jax.experimental import pallas as pl
from jax.experimental.pallas import tpu as pltpu


def _round_up(x, m):
    return ((x + m - 1) // m) * m


_VMEM_LIMIT = 48 * 1024 * 1024   # fits v7x (64 MiB physical); plenty for v5e/v6e.


# ---------------------------------------------------------------------------
# Kernel 0 (prologue): fold the channel axis into the classifier weight.
#   W_eff[hw, cl] = sum_c x[c, hw] * W[c, hw, cl]
# x_t is lane-sparse (last dim = C), but K0 is a one-pass, HBM-bound prologue
# (<1% of runtime when N >> C) so the per-c column broadcasts are acceptable.
# ---------------------------------------------------------------------------
def _w_eff_kernel(xt_ref, w_ref, weff_ref, *, C):
    # xt_ref: (TK0, C) f32, w_ref: (C, TK0, TCL0), weff_ref: (TK0, TCL0)
    acc = xt_ref[:, 0:1].astype(jnp.float32) * w_ref[0].astype(jnp.float32)
    for c in range(1, C):                      # C is tiny (3-4): static unroll
        acc += xt_ref[:, c:c + 1].astype(jnp.float32) * w_ref[c].astype(jnp.float32)
    weff_ref[...] = acc.astype(weff_ref.dtype)


# ---------------------------------------------------------------------------
# Kernel 1: p = masks @ W_eff + b      (reduction over HW on the last grid axis)
# ---------------------------------------------------------------------------
def _p_kernel(masks_ref, weff_ref, b_ref, p_ref, acc_ref):
    k = pl.program_id(2)

    @pl.when(k == 0)
    def _init():  # bias broadcast only once per output tile
        acc_ref[...] = jnp.broadcast_to(b_ref[...], acc_ref.shape)

    acc_ref[...] += jnp.dot(masks_ref[...], weff_ref[...],
                            preferred_element_type=jnp.float32)

    @pl.when(k == pl.num_programs(2) - 1)
    def _done():
        p_ref[...] = acc_ref[...].astype(p_ref.dtype)


# ---------------------------------------------------------------------------
# Kernel 2: sal = (p^T @ masks) * scale   (reduction over N on the last grid
# axis; contraction over axis 0 of both operands -> no explicit transpose)
# ---------------------------------------------------------------------------
def _sal_kernel(p_ref, masks_ref, sal_ref, acc_ref, *, scale):
    n = pl.program_id(2)

    @pl.when(n == 0)
    def _init():
        acc_ref[...] = jnp.zeros_like(acc_ref)

    acc_ref[...] += lax.dot_general(
        p_ref[...], masks_ref[...],
        dimension_numbers=(((0,), (0,)), ((), ())),
        preferred_element_type=jnp.float32)

    @pl.when(n == pl.num_programs(2) - 1)
    def _done():  # scale applied once per output tile
        sal_ref[...] = (acc_ref[...] * scale).astype(sal_ref.dtype)


def rise_forward(x, masks, w_cls, b_cls, p1, *, compute_dtype=jnp.bfloat16):
    """RISE.forward.  x: (1, C, H, W), masks: (N, H, W)  ->  sal: (CL, H, W)."""
    _, C, H, W = x.shape
    N = masks.shape[0]
    HW = H * W
    CL = w_cls.shape[-1]

    # --- Tile sizes ----------------------------------------------------------
    # TCL covers the full padded class dim (up to 1024) so masks is streamed
    # through K1/K2 exactly once.  TN/TK sized for ~12-18 MiB double-buffered
    # working sets (fits v7x's 64 MiB VMEM; v6e/v5e have even more headroom).
    TN = min(512, _round_up(N, 16))               # 16 -> full packed bf16 sublanes
    TCL = min(1024, _round_up(CL, 128))           # lane-dense outputs (>=128)
    TK = min(1024, _round_up(HW, 128))
    N_pad = _round_up(N, TN)
    CL_pad = _round_up(CL, TCL)
    HW_pad = _round_up(HW, TK)

    # K0 tiles are decoupled (its weight block is C*TK0*TCL0): keep them small
    # while still dividing the padded dims chosen above.
    TK0 = 512 if TK % 512 == 0 else TK
    TCL0 = 256 if TCL % 256 == 0 else TCL

    f32 = jnp.float32

    # Zero-padding is exact: padded mask rows / HW columns / CL columns
    # contribute nothing to p or sal, and the padding is sliced off at the end.
    # Cast to compute_dtype BEFORE padding so no padded f32 copy of the largest
    # tensors is ever materialized in HBM.
    masks_flat = jnp.pad(masks.reshape(N, HW).astype(compute_dtype),
                         ((0, N_pad - N), (0, HW_pad - HW)))
    x_t = jnp.pad(x[0].reshape(C, HW).T.astype(f32),
                  ((0, HW_pad - HW), (0, 0)))                      # (HW_pad, C)
    w3 = jnp.pad(w_cls.reshape(C, HW, CL).astype(compute_dtype),
                 ((0, 0), (0, HW_pad - HW), (0, CL_pad - CL)))
    b2 = jnp.pad(b_cls.reshape(1, CL).astype(f32), ((0, 0), (0, CL_pad - CL)))

    # --- K0: W_eff = sum_c x_c * W_c ----------------------------------------
    w_eff = pl.pallas_call(
        functools.partial(_w_eff_kernel, C=C),
        out_shape=jax.ShapeDtypeStruct((HW_pad, CL_pad), compute_dtype),
        grid=(HW_pad // TK0, CL_pad // TCL0),
        in_specs=[pl.BlockSpec((TK0, C), lambda i, j: (i, 0)),
                  pl.BlockSpec((C, TK0, TCL0), lambda i, j: (0, i, j))],
        out_specs=pl.BlockSpec((TK0, TCL0), lambda i, j: (i, j)),
        compiler_params=pltpu.CompilerParams(
            dimension_semantics=("parallel", "parallel"),
            vmem_limit_bytes=_VMEM_LIMIT),
    )(x_t, w3)

    # --- K1: p = masks @ W_eff + b  (p emitted in float32) -------------------
    p = pl.pallas_call(
        _p_kernel,
        out_shape=jax.ShapeDtypeStruct((N_pad, CL_pad), jnp.float32),
        grid=(N_pad // TN, CL_pad // TCL, HW_pad // TK),
        in_specs=[pl.BlockSpec((TN, TK), lambda i, j, k: (i, k)),
                  pl.BlockSpec((TK, TCL), lambda i, j, k: (k, j)),
                  pl.BlockSpec((1, TCL), lambda i, j, k: (0, j))],
        out_specs=pl.BlockSpec((TN, TCL), lambda i, j, k: (i, j)),
        scratch_shapes=[pltpu.VMEM((TN, TCL), jnp.float32)],
        compiler_params=pltpu.CompilerParams(
            dimension_semantics=("parallel", "parallel", "arbitrary"),
            vmem_limit_bytes=_VMEM_LIMIT),
    )(masks_flat, w_eff, b2)

    # --- K2: sal = p^T @ masks / (N * p1) -----------------------------------
    # HW axis (parallel, typically >= 2 blocks) keeps both TensorCores busy on
    # v7x even when the CL axis collapses to a single block.
    # TODO(synk): on v6e/v5e (128 MiB VMEM) a fused K1+K2 with a resident masks
    # row-slab would halve total masks HBM reads for small CL.
    scale = 1.0 / (float(N) * float(p1))
    sal = pl.pallas_call(
        functools.partial(_sal_kernel, scale=scale),
        out_shape=jax.ShapeDtypeStruct((CL_pad, HW_pad), jnp.float32),
        grid=(CL_pad // TCL, HW_pad // TK, N_pad // TN),
        in_specs=[pl.BlockSpec((TN, TCL), lambda i, j, n: (n, i)),
                  pl.BlockSpec((TN, TK), lambda i, j, n: (n, j))],
        out_specs=pl.BlockSpec((TCL, TK), lambda i, j, n: (i, j)),
        scratch_shapes=[pltpu.VMEM((TCL, TK), jnp.float32)],
        compiler_params=pltpu.CompilerParams(
            dimension_semantics=("parallel", "parallel", "arbitrary"),
            vmem_limit_bytes=_VMEM_LIMIT),
    )(p, masks_flat)

    return sal[:CL, :HW].reshape(CL, H, W)


# ---------------------------------------------------------------------------
# Pure-JAX reference (mirrors the PyTorch forward semantics exactly).
# ---------------------------------------------------------------------------
def rise_reference(x, masks, w_cls, b_cls, p1):
    N = masks.shape[0]
    _, C, H, W = x.shape
    stack = masks[:, None, :, :] * x                        # (N, C, H, W)
    p = stack.reshape(N, -1) @ w_cls + b_cls                # (N, CL)
    sal = p.T @ masks.reshape(N, H * W)                     # (CL, HW)
    sal = sal / N / p1
    return sal.reshape(-1, H, W)


if __name__ == "__main__":
    key = jax.random.PRNGKey(0)
    k_x, k_grid, k_w, k_b = jax.random.split(key, 4)

    # Small shapes: one image, 4 channels, 16x16 spatial, 8 masks, 8 classes.
    B, C, H, W = 1, 4, 16, 16
    N, CL = 8, 8
    s, p1 = 4, 0.5

    x = jax.random.normal(k_x, (B, C, H, W), dtype=jnp.float32)

    # Deterministic RISE-style masks: random binary s x s grid bilinearly
    # upsampled to the image size (random crop offsets omitted for determinism).
    grid01 = (jax.random.uniform(k_grid, (N, s, s)) < p1).astype(jnp.float32)
    masks = jax.image.resize(grid01, (N, H, W), method="bilinear")

    # Deterministic synthetic linear classifier ("self.model").
    w_cls = jax.random.normal(k_w, (C * H * W, CL), dtype=jnp.float32) * 0.02
    b_cls = jax.random.normal(k_b, (CL,), dtype=jnp.float32) * 0.1

    sal_ref = rise_reference(x, masks, w_cls, b_cls, p1)

    # f32 path: tight check against the reference.
    sal_f32 = jax.block_until_ready(
        rise_forward(x, masks, w_cls, b_cls, p1, compute_dtype=jnp.float32))
    assert sal_f32.shape == (CL, H, W), sal_f32.shape
    assert jnp.allclose(sal_f32, sal_ref, atol=1e-4, rtol=1e-4), (
        float(jnp.max(jnp.abs(sal_f32 - sal_ref))))

    # bf16 path (default / fast): relaxed tolerance for bf16 operand quantization.
    sal_bf16 = jax.block_until_ready(rise_forward(x, masks, w_cls, b_cls, p1))
    assert sal_bf16.shape == (CL, H, W), sal_bf16.shape
    assert jnp.allclose(sal_bf16, sal_ref, atol=2e-2, rtol=2e-2), (
        float(jnp.max(jnp.abs(sal_bf16 - sal_ref))))

    print("KERNEL_OK")
</pallas_src>

<mosaic_0001>
module attributes {stable_mosaic.version = 11 : i64} {
  func.func @_w_eff_kernel(%arg0: i32, %arg1: i32, %arg2: memref<256x4xf32, #tpu.memory_space<vmem>>, %arg3: memref<4x256x128xf32, #tpu.memory_space<vmem>>, %arg4: memref<256x128xf32, #tpu.memory_space<vmem>>) attributes {dimension_semantics = [#tpu.dimension_semantics<parallel>, #tpu.dimension_semantics<parallel>], iteration_bounds = array<i64: 1, 1>, scalar_prefetch = 0 : i64, scratch_operands = 0 : i64, tpu.core_type = #tpu.core_type<tc>, window_params = [{transform_indices = @transform_0, window_bounds = array<i64: 256, 4>}, {transform_indices = @transform_1, window_bounds = array<i64: 4, 256, 128>}, {transform_indices = @transform_2, window_bounds = array<i64: 256, 128>}]} {
    %c0 = arith.constant 0 : index
    %c0_0 = arith.constant 0 : index
    %0 = vector.load %arg2[%c0, %c0_0] : memref<256x4xf32, #tpu.memory_space<vmem>>, vector<256x1xf32>
    %c0_1 = arith.constant 0 : index
    %c0_2 = arith.constant 0 : index
    %c0_3 = arith.constant 0 : index
    %1 = vector.load %arg3[%c0_1, %c0_2, %c0_3] : memref<4x256x128xf32, #tpu.memory_space<vmem>>, vector<1x256x128xf32>
    %2 = vector.shape_cast %1 : vector<1x256x128xf32> to vector<256x128xf32>
    %3 = vector.broadcast %0 : vector<256x1xf32> to vector<256x128xf32>
    %4 = arith.mulf %3, %2 : vector<256x128xf32>
    %c0_4 = arith.constant 0 : index
    %c1 = arith.constant 1 : index
    %5 = vector.load %arg2[%c0_4, %c1] : memref<256x4xf32, #tpu.memory_space<vmem>>, vector<256x1xf32>
    %c1_5 = arith.constant 1 : index
    %c0_6 = arith.constant 0 : index
    %c0_7 = arith.constant 0 : index
    %6 = vector.load %arg3[%c1_5, %c0_6, %c0_7] : memref<4x256x128xf32, #tpu.memory_space<vmem>>, vector<1x256x128xf32>
    %7 = vector.shape_cast %6 : vector<1x256x128xf32> to vector<256x128xf32>
    %8 = vector.broadcast %5 : vector<256x1xf32> to vector<256x128xf32>
    %9 = arith.mulf %8, %7 : vector<256x128xf32>
    %10 = arith.addf %4, %9 : vector<256x128xf32>
    %c0_8 = arith.constant 0 : index
    %c2 = arith.constant 2 : index
    %11 = vector.load %arg2[%c0_8, %c2] : memref<256x4xf32, #tpu.memory_space<vmem>>, vector<256x1xf32>
    %c2_9 = arith.constant 2 : index
    %c0_10 = arith.constant 0 : index
    %c0_11 = arith.constant 0 : index
    %12 = vector.load %arg3[%c2_9, %c0_10, %c0_11] : memref<4x256x128xf32, #tpu.memory_space<vmem>>, vector<1x256x128xf32>
    %13 = vector.shape_cast %12 : vector<1x256x128xf32> to vector<256x128xf32>
    %14 = vector.broadcast %11 : vector<256x1xf32> to vector<256x128xf32>
    %15 = arith.mulf %14, %13 : vector<256x128xf32>
    %16 = arith.addf %10, %15 : vector<256x128xf32>
    %c0_12 = arith.constant 0 : index
    %c3 = arith.constant 3 : index
    %17 = vector.load %arg2[%c0_12, %c3] : memref<256x4xf32, #tpu.memory_space<vmem>>, vector<256x1xf32>
    %c3_13 = arith.constant 3 : index
    %c0_14 = arith.constant 0 : index
    %c0_15 = arith.constant 0 : index
    %18 = vector.load %arg3[%c3_13, %c0_14, %c0_15] : memref<4x256x128xf32, #tpu.memory_space<vmem>>, vector<1x256x128xf32>
    %19 = vector.shape_cast %18 : vector<1x256x128xf32> to vector<256x128xf32>
    %20 = vector.broadcast %17 : vector<256x1xf32> to vector<256x128xf32>
    %21 = arith.mulf %20, %19 : vector<256x128xf32>
    %22 = arith.addf %16, %21 : vector<256x128xf32>
    %c0_16 = arith.constant 0 : index
    %c0_17 = arith.constant 0 : index
    %23 = vector.load %arg4[%c0_16, %c0_17] : memref<256x128xf32, #tpu.memory_space<vmem>>, vector<256x128xf32>
    tpu.vector_store %arg4[%c0_16, %c0_17], %22 {strides = array<i32>} : memref<256x128xf32, #tpu.memory_space<vmem>>, vector<256x128xf32>,
    return
  }
  func.func @transform_0(%arg0: i32, %arg1: i32) -> (i32, i32) {
    %c0_i32 = arith.constant 0 : i32
    %c0_i32_0 = arith.constant 0 : i32
    return %arg0, %c0_i32 : i32, i32
  }
  func.func @transform_1(%arg0: i32, %arg1: i32) -> (i32, i32, i32) {
    %c0_i32 = arith.constant 0 : i32
    %c0_i32_0 = arith.constant 0 : i32
    return %c0_i32, %arg0, %arg1 : i32, i32, i32
  }
  func.func @transform_2(%arg0: i32, %arg1: i32) -> (i32, i32) {
    %c0_i32 = arith.constant 0 : i32
    return %arg0, %arg1 : i32, i32
  }
}

</mosaic_0001>

<llo_original>
// kernel: tpu_custom_call.1
$region0: #{tpu_custom_call.1}
  #allocation0 [shape = 'u32[]', space=smem, size = 0x4, offset = 0x4, fixed_abs, tag = 'smem constant byte address 0x4 - core index']
  #allocation1 [shape = 'u32[72,128]{1,0:T(1,128)}', space=vmem, size = 0x9000, scoped, tag = 'internal scratch']
  %s0 = inlined_call_operand.vmem [shape: f32[256,4], index: 0, kind: input, shape index: {}]
  %s1 = inlined_call_operand.hbm [shape: f32[4,256,128], index: 1, kind: input, shape index: {}]
  %s2 = inlined_call_operand.hbm [shape: f32[256,128], index: 2, kind: output, shape index: {}]
  %s3 = sld [smem:[#allocation0]]
  $region22: #{tpu_custom_call.1} parent=0
    _
  %s5 = ssub.s32 1, %s3
  %s6 = scalar_select 0, %s5, %s3
  $region1: #{tpu_custom_call.1} parent=0
    #allocation2 [shape = 'u8[524288]{0}', space=vmem, size = 0x80000, scoped, tag = 'input window, operand 1, single buffered']
    #allocation3 [shape = 's32[1]{0}', space=sflag, size = 0x4, scoped, tag = 'scoped memory for tpu_custom_call.1']
    #allocation4 [shape = 's32[1]{0}', space=sflag, size = 0x4, scoped, tag = 'scoped memory for tpu_custom_call.1']
    #allocation5 [shape = 'u8[131072]{0}', space=vmem, size = 0x20000, scoped, tag = 'output window, operand 0, single buffered']
    %7 = vsyncpa [#allocation3], 0
    %8 = vsyncpa [#allocation4], 0
    // Predicated region
    $region2: #{tpu_custom_call.1} parent=1 // pred_check
      _
    $region3: #{tpu_custom_call.1} parent=1 // pred_check_branch
      %10 = sbr.rel (0) target = $region5
    $region4: #{tpu_custom_call.1} parent=1 // pred_region
      _
    $region5: #{tpu_custom_call.1} parent=1 // pred_fallthru
      _
    // Predicated region
    $region6: #{tpu_custom_call.1} parent=1 // pred_check
      _
    $region7: #{tpu_custom_call.1} parent=1 // pred_check_branch
      %12 = sbr.rel (0) target = $region9
    $region8: #{tpu_custom_call.1} parent=1 // pred_region
      %14 = vsyncadd [#allocation3], 0
      %s15 = sshll.u32 %s1, 4
      %s16 = int_to_ptr.hbm [resolvable:$true] %s15
      %s17 = sshll.u32 [#allocation2], 4
      %s18 = int_to_ptr.vmem [resolvable:$true] %s17
      %23 = dma.hbm_to_vmem [thread:$0]  %s16, 16384, %s18, [#allocation3], 128, 128, 8
    $region9: #{tpu_custom_call.1} parent=1 // pred_fallthru
      _
    // Predicated region
    $region10: #{tpu_custom_call.1} parent=1 // pred_check
      _
    $region11: #{tpu_custom_call.1} parent=1 // pred_check_branch
      %25 = sbr.rel (0) target = $region13
    $region12: #{tpu_custom_call.1} parent=1 // pred_region
      %27 = dma.done [#allocation3], 16384
    $region13: #{tpu_custom_call.1} parent=1 // pred_fallthru
      _
    %v28 = vld [vmem:[%s0] sm:$0xff]
    %v29 = vld [vmem:[%s0 + $0x8] sm:$0xff]
    %v30 = vld [vmem:[%s0 + $0x10] sm:$0xff]
    %v31 = vld [vmem:[%s0 + $0x18] sm:$0xff]
    %v32 = vld [vmem:[%s0 + $0x20] sm:$0xff]
    %v33 = vld [vmem:[%s0 + $0x28] sm:$0xff]
    %v34 = vld [vmem:[%s0 + $0x30] sm:$0xff]
    %v35 = vld [vmem:[%s0 + $0x38] sm:$0xff]
    %v36 = vld [vmem:[%s0 + $0x40] sm:$0xff]
    %v37 = vld [vmem:[%s0 + $0x48] sm:$0xff]
    %v38 = vld [vmem:[%s0 + $0x50] sm:$0xff]
    %v39 = vld [vmem:[%s0 + $0x58] sm:$0xff]
    %v40 = vld [vmem:[%s0 + $0x60] sm:$0xff]
    %v41 = vld [vmem:[%s0 + $0x68] sm:$0xff]
    %v42 = vld [vmem:[%s0 + $0x70] sm:$0xff]
    %v43 = vld [vmem:[%s0 + $0x78] sm:$0xff]
    %v44 = vld [vmem:[%s0 + $0x80] sm:$0xff]
    %v45 = vld [vmem:[%s0 + $0x88] sm:$0xff]
    %v46 = vld [vmem:[%s0 + $0x90] sm:$0xff]
    %v47 = vld [vmem:[%s0 + $0x98] sm:$0xff]
    %v48 = vld [vmem:[%s0 + $0xa0] sm:$0xff]
    %v49 = vld [vmem:[%s0 + $0xa8] sm:$0xff]
    %v50 = vld [vmem:[%s0 + $0xb0] sm:$0xff]
    %v51 = vld [vmem:[%s0 + $0xb8] sm:$0xff]
    %v52 = vld [vmem:[%s0 + $0xc0] sm:$0xff]
    %v53 = vld [vmem:[%s0 + $0xc8] sm:$0xff]
    %v54 = vld [vmem:[%s0 + $0xd0] sm:$0xff]
    %v55 = vld [vmem:[%s0 + $0xd8] sm:$0xff]
    %v56 = vld [vmem:[%s0 + $0xe0] sm:$0xff]
    %v57 = vld [vmem:[%s0 + $0xe8] sm:$0xff]
    %v58 = vld [vmem:[%s0 + $0xf0] sm:$0xff]
    %v59 = vld [vmem:[%s0 + $0xf8] sm:$0xff]
    %v60 = vld [vmem:[#allocation2] sm:$0xff]
    %v61 = vld [vmem:[#allocation2 + $0x8] sm:$0xff]
    %v62 = vld [vmem:[#allocation2 + $0x10] sm:$0xff]
    %v63 = vld [vmem:[#allocation2 + $0x18] sm:$0xff]
    %v64 = vld [vmem:[#allocation2 + $0x20] sm:$0xff]
    %v65 = vld [vmem:[#allocation2 + $0x28] sm:$0xff]
    %v66 = vld [vmem:[#allocation2 + $0x30] sm:$0xff]
    %v67 = vld [vmem:[#allocation2 + $0x38] sm:$0xff]
    %v68 = vld [vmem:[#allocation2 + $0x40] sm:$0xff]
    %v69 = vld [vmem:[#allocation2 + $0x48] sm:$0xff]
    %v70 = vld [vmem:[#allocation2 + $0x50] sm:$0xff]
    %v71 = vld [vmem:[#allocation2 + $0x58] sm:$0xff]
    %v72 = vld [vmem:[#allocation2 + $0x60] sm:$0xff]
    %v73 = vld [vmem:[#allocation2 + $0x68] sm:$0xff]
    %v74 = vld [vmem:[#allocation2 + $0x70] sm:$0xff]
    %v75 = vld [vmem:[#allocation2 + $0x78] sm:$0xff]
    %v76 = vld [vmem:[#allocation2 + $0x80] sm:$0xff]
    %v77 = vld [vmem:[#allocation2 + $0x88] sm:$0xff]
    %v78 = vld [vmem:[#allocation2 + $0x90] sm:$0xff]
    %v79 = vld [vmem:[#allocation2 + $0x98] sm:$0xff]
    %v80 = vld [vmem:[#allocation2 + $0xa0] sm:$0xff]
    %v81 = vld [vmem:[#allocation2 + $0xa8] sm:$0xff]
    %v82 = vld [vmem:[#allocation2 + $0xb0] sm:$0xff]
    %v83 = vld [vmem:[#allocation2 + $0xb8] sm:$0xff]
    %v84 = vld [vmem:[#allocation2 + $0xc0] sm:$0xff]
    %v85 = vld [vmem:[#allocation2 + $0xc8] sm:$0xff]
    %v86 = vld [vmem:[#allocation2 + $0xd0] sm:$0xff]
    %v87 = vld [vmem:[#allocation2 + $0xd8] sm:$0xff]
    %v88 = vld [vmem:[#allocation2 + $0xe0] sm:$0xff]
    %v89 = vld [vmem:[#allocation2 + $0xe8] sm:$0xff]
    %v90 = vld [vmem:[#allocation2 + $0xf0] sm:$0xff]
    %v91 = vld [vmem:[#allocation2 + $0xf8] sm:$0xff]
    %93 = vset.pattern.permute.xlu0 0
    %94 = vperm.xlu0 %93, %v28
    %v95 = vpop.permute.xlu0 %94
    %98 = vset.pattern.permute.xlu0 0
    %99 = vperm.xlu0 %98, %v29
    %v100 = vpop.permute.xlu0 %99
    %103 = vset.pattern.permute.xlu0 0
    %104 = vperm.xlu0 %103, %v30
    %v105 = vpop.permute.xlu0 %104
    %108 = vset.pattern.permute.xlu0 0
    %109 = vperm.xlu0 %108, %v31
    %v110 = vpop.permute.xlu0 %109
    %113 = vset.pattern.permute.xlu0 0
    %114 = vperm.xlu0 %113, %v32
    %v115 = vpop.permute.xlu0 %114
    %118 = vset.pattern.permute.xlu0 0
    %119 = vperm.xlu0 %118, %v33
    %v120 = vpop.permute.xlu0 %119
    %123 = vset.pattern.permute.xlu0 0
    %124 = vperm.xlu0 %123, %v34
    %v125 = vpop.permute.xlu0 %124
    %128 = vset.pattern.permute.xlu0 0
    %129 = vperm.xlu0 %128, %v35
    %v130 = vpop.permute.xlu0 %129
    %133 = vset.pattern.permute.xlu0 0
    %134 = vperm.xlu0 %133, %v36
    %v135 = vpop.permute.xlu0 %134
    %138 = vset.pattern.permute.xlu0 0
    %139 = vperm.xlu0 %138, %v37
    %v140 = vpop.permute.xlu0 %139
    %143 = vset.pattern.permute.xlu0 0
    %144 = vperm.xlu0 %143, %v38
    %v145 = vpop.permute.xlu0 %144
    %148 = vset.pattern.permute.xlu0 0
    %149 = vperm.xlu0 %148, %v39
    %v150 = vpop.permute.xlu0 %149
    %153 = vset.pattern.permute.xlu0 0
    %154 = vperm.xlu0 %153, %v40
    %v155 = vpop.permute.xlu0 %154
    %158 = vset.pattern.permute.xlu0 0
    %159 = vperm.xlu0 %158, %v41
    %v160 = vpop.permute.xlu0 %159
    %163 = vset.pattern.permute.xlu0 0
    %164 = vperm.xlu0 %163, %v42
    %v165 = vpop.permute.xlu0 %164
    %168 = vset.pattern.permute.xlu0 0
    %169 = vperm.xlu0 %168, %v43
    %v170 = vpop.permute.xlu0 %169
    %173 = vset.pattern.permute.xlu0 0
    %174 = vperm.xlu0 %173, %v44
    %v175 = vpop.permute.xlu0 %174
    %178 = vset.pattern.permute.xlu0 0
    %179 = vperm.xlu0 %178, %v45
    %v180 = vpop.permute.xlu0 %179
    %183 = vset.pattern.permute.xlu0 0
    %184 = vperm.xlu0 %183, %v46
    %v185 = vpop.permute.xlu0 %184
    %188 = vset.pattern.permute.xlu0 0
    %189 = vperm.xlu0 %188, %v47
    %v190 = vpop.permute.xlu0 %189
    %193 = vset.pattern.permute.xlu0 0
    %194 = vperm.xlu0 %193, %v48
    %v195 = vpop.permute.xlu0 %194
    %198 = vset.pattern.permute.xlu0 0
    %199 = vperm.xlu0 %198, %v49
    %v200 = vpop.permute.xlu0 %199
    %203 = vset.pattern.permute.xlu0 0
    %204 = vperm.xlu0 %203, %v50
    %v205 = vpop.permute.xlu0 %204
    %208 = vset.pattern.permute.xlu0 0
    %209 = vperm.xlu0 %208, %v51
    %v210 = vpop.permute.xlu0 %209
    %213 = vset.pattern.permute.xlu0 0
    %214 = vperm.xlu0 %213, %v52
    %v215 = vpop.permute.xlu0 %214
    %218 = vset.pattern.permute.xlu0 0
    %219 = vperm.xlu0 %218, %v53
    %v220 = vpop.permute.xlu0 %219
    %223 = vset.pattern.permute.xlu0 0
    %224 = vperm.xlu0 %223, %v54
    %v225 = vpop.permute.xlu0 %224
    %228 = vset.pattern.permute.xlu0 0
    %229 = vperm.xlu0 %228, %v55
    %v230 = vpop.permute.xlu0 %229
    %233 = vset.pattern.permute.xlu0 0
    %234 = vperm.xlu0 %233, %v56
    %v235 = vpop.permute.xlu0 %234
    %238 = vset.pattern.permute.xlu0 0
    %239 = vperm.xlu0 %238, %v57
    %v240 = vpop.permute.xlu0 %239
    %243 = vset.pattern.permute.xlu0 0
    %244 = vperm.xlu0 %243, %v58
    %v245 = vpop.permute.xlu0 %244
    %248 = vset.pattern.permute.xlu0 0
    %249 = vperm.xlu0 %248, %v59
    %v250 = vpop.permute.xlu0 %249
    %v252 = vmul.f32 %v95, %v60
    %v253 = vmul.f32 %v100, %v61
    %v254 = vmul.f32 %v105, %v62
    %v255 = vmul.f32 %v110, %v63
    %v256 = vmul.f32 %v115, %v64
    %v257 = vmul.f32 %v120, %v65
    %v258 = vmul.f32 %v125, %v66
    %v259 = vmul.f32 %v130, %v67
    %v260 = vmul.f32 %v135, %v68
    %v261 = vmul.f32 %v140, %v69
    %v262 = vmul.f32 %v145, %v70
    %v263 = vmul.f32 %v150, %v71
    %v264 = vmul.f32 %v155, %v72
    %v265 = vmul.f32 %v160, %v73
    %v266 = vmul.f32 %v165, %v74
    %v267 = vmul.f32 %v170, %v75
    %v268 = vmul.f32 %v175, %v76
    %v269 = vmul.f32 %v180, %v77
    %v270 = vmul.f32 %v185, %v78
    %v271 = vmul.f32 %v190, %v79
    %v272 = vmul.f32 %v195, %v80
    %v273 = vmul.f32 %v200, %v81
    %v274 = vmul.f32 %v205, %v82
    %v275 = vmul.f32 %v210, %v83
    %v276 = vmul.f32 %v215, %v84
    %v277 = vmul.f32 %v220, %v85
    %v278 = vmul.f32 %v225, %v86
    %v279 = vmul.f32 %v230, %v87
    %v280 = vmul.f32 %v235, %v88
    %v281 = vmul.f32 %v240, %v89
    %v282 = vmul.f32 %v245, %v90
    %v283 = vmul.f32 %v250, %v91
    %s284 = scalar_lea.vmem [#allocation2], 256
    %v285 = vld [vmem:[%s284] sm:$0xff]
    %v286 = vld [vmem:[%s284 + $0x8] sm:$0xff]
    %v287 = vld [vmem:[%s284 + $0x10] sm:$0xff]
    %v288 = vld [vmem:[%s284 + $0x18] sm:$0xff]
    %v289 = vld [vmem:[%s284 + $0x20] sm:$0xff]
    %v290 = vld [vmem:[%s284 + $0x28] sm:$0xff]
    %v291 = vld [vmem:[%s284 + $0x30] sm:$0xff]
    %v292 = vld [vmem:[%s284 + $0x38] sm:$0xff]
    %v293 = vld [vmem:[%s284 + $0x40] sm:$0xff]
    %v294 = vld [vmem:[%s284 + $0x48] sm:$0xff]
    %v295 = vld [vmem:[%s284 + $0x50] sm:$0xff]
    %v296 = vld [vmem:[%s284 + $0x58] sm:$0xff]
    %v297 = vld [vmem:[%s284 + $0x60] sm:$0xff]
    %v298 = vld [vmem:[%s284 + $0x68] sm:$0xff]
    %v299 = vld [vmem:[%s284 + $0x70] sm:$0xff]
    %v300 = vld [vmem:[%s284 + $0x78] sm:$0xff]
    %v301 = vld [vmem:[%s284 + $0x80] sm:$0xff]
    %v302 = vld [vmem:[%s284 + $0x88] sm:$0xff]
    %v303 = vld [vmem:[%s284 + $0x90] sm:$0xff]
    %v304 = vld [vmem:[%s284 + $0x98] sm:$0xff]
    %v305 = vld [vmem:[%s284 + $0xa0] sm:$0xff]
    %v306 = vld [vmem:[%s284 + $0xa8] sm:$0xff]
    %v307 = vld [vmem:[%s284 + $0xb0] sm:$0xff]
    %v308 = vld [vmem:[%s284 + $0xb8] sm:$0xff]
    %v309 = vld [vmem:[%s284 + $0xc0] sm:$0xff]
    %v310 = vld [vmem:[%s284 + $0xc8] sm:$0xff]
    %v311 = vld [vmem:[%s284 + $0xd0] sm:$0xff]
    %v312 = vld [vmem:[%s284 + $0xd8] sm:$0xff]
    %v313 = vld [vmem:[%s284 + $0xe0] sm:$0xff]
    %v314 = vld [vmem:[%s284 + $0xe8] sm:$0xff]
    %v315 = vld [vmem:[%s284 + $0xf0] sm:$0xff]
    %v316 = vld [vmem:[%s284 + $0xf8] sm:$0xff]
    %317 = vset.pattern.permute.xlu0 1
    %318 = vperm.xlu0 %317, %v28
    %v319 = vpop.permute.xlu0 %318
    %321 = vset.pattern.permute.xlu0 1
    %322 = vperm.xlu0 %321, %v29
    %v323 = vpop.permute.xlu0 %322
    %325 = vset.pattern.permute.xlu0 1
    %326 = vperm.xlu0 %325, %v30
    %v327 = vpop.permute.xlu0 %326
    %329 = vset.pattern.permute.xlu0 1
    %330 = vperm.xlu0 %329, %v31
    %v331 = vpop.permute.xlu0 %330
    %333 = vset.pattern.permute.xlu0 1
    %334 = vperm.xlu0 %333, %v32
    %v335 = vpop.permute.xlu0 %334
    %337 = vset.pattern.permute.xlu0 1
    %338 = vperm.xlu0 %337, %v33
    %v339 = vpop.permute.xlu0 %338
    %341 = vset.pattern.permute.xlu0 1
    %342 = vperm.xlu0 %341, %v34
    %v343 = vpop.permute.xlu0 %342
    %345 = vset.pattern.permute.xlu0 1
    %346 = vperm.xlu0 %345, %v35
    %v347 = vpop.permute.xlu0 %346
    %349 = vset.pattern.permute.xlu0 1
    %350 = vperm.xlu0 %349, %v36
    %v351 = vpop.permute.xlu0 %350
    %353 = vset.pattern.permute.xlu0 1
    %354 = vperm.xlu0 %353, %v37
    %v355 = vpop.permute.xlu0 %354
    %357 = vset.pattern.permute.xlu0 1
    %358 = vperm.xlu0 %357, %v38
    %v359 = vpop.permute.xlu0 %358
    %361 = vset.pattern.permute.xlu0 1
    %362 = vperm.xlu0 %361, %v39
    %v363 = vpop.permute.xlu0 %362
    %365 = vset.pattern.permute.xlu0 1
    %366 = vperm.xlu0 %365, %v40
    %v367 = vpop.permute.xlu0 %366
    %369 = vset.pattern.permute.xlu0 1
    %370 = vperm.xlu0 %369, %v41
    %v371 = vpop.permute.xlu0 %370
    %373 = vset.pattern.permute.xlu0 1
    %374 = vperm.xlu0 %373, %v42
    %v375 = vpop.permute.xlu0 %374
    %377 = vset.pattern.permute.xlu0 1
    %378 = vperm.xlu0 %377, %v43
    %v379 = vpop.permute.xlu0 %378
    %381 = vset.pattern.permute.xlu0 1
    %382 = vperm.xlu0 %381, %v44
    %v383 = vpop.permute.xlu0 %382
    %385 = vset.pattern.permute.xlu0 1
    %386 = vperm.xlu0 %385, %v45
    %v387 = vpop.permute.xlu0 %386
    %389 = vset.pattern.permute.xlu0 1
    %390 = vperm.xlu0 %389, %v46
    %v391 = vpop.permute.xlu0 %390
    %393 = vset.pattern.permute.xlu0 1
    %394 = vperm.xlu0 %393, %v47
    %v395 = vpop.permute.xlu0 %394
    %397 = vset.pattern.permute.xlu0 1
    %398 = vperm.xlu0 %397, %v48
    %v399 = vpop.permute.xlu0 %398
    %401 = vset.pattern.permute.xlu0 1
    %402 = vperm.xlu0 %401, %v49
    %v403 = vpop.permute.xlu0 %402
    %405 = vset.pattern.permute.xlu0 1
    %406 = vperm.xlu0 %405, %v50
    %v407 = vpop.permute.xlu0 %406
    %409 = vset.pattern.permute.xlu0 1
    %410 = vperm.xlu0 %409, %v51
    %v411 = vpop.permute.xlu0 %410
    %413 = vset.pattern.permute.xlu0 1
    %414 = vperm.xlu0 %413, %v52
    %v415 = vpop.permute.xlu0 %414
    %417 = vset.pattern.permute.xlu0 1
    %418 = vperm.xlu0 %417, %v53
    %v419 = vpop.permute.xlu0 %418
    %421 = vset.pattern.permute.xlu0 1
    %422 = vperm.xlu0 %421, %v54
    %v423 = vpop.permute.xlu0 %422
    %425 = vset.pattern.permute.xlu0 1
    %426 = vperm.xlu0 %425, %v55
    %v427 = vpop.permute.xlu0 %426
    %429 = vset.pattern.permute.xlu0 1
    %430 = vperm.xlu0 %429, %v56
    %v431 = vpop.permute.xlu0 %430
    %433 = vset.pattern.permute.xlu0 1
    %434 = vperm.xlu0 %433, %v57
    %v435 = vpop.permute.xlu0 %434
    %437 = vset.pattern.permute.xlu0 1
    %438 = vperm.xlu0 %437, %v58
    %v439 = vpop.permute.xlu0 %438
    %441 = vset.pattern.permute.xlu0 1
    %442 = vperm.xlu0 %441, %v59
    %v443 = vpop.permute.xlu0 %442
    %v445 = vmul.f32 %v319, %v285
    %v446 = vmul.f32 %v323, %v286
    %v447 = vmul.f32 %v327, %v287
    %v448 = vmul.f32 %v331, %v288
    %v449 = vmul.f32 %v335, %v289
    %v450 = vmul.f32 %v339, %v290
    %v451 = vmul.f32 %v343, %v291
    %v452 = vmul.f32 %v347, %v292
    %v453 = vmul.f32 %v351, %v293
    %v454 = vmul.f32 %v355, %v294
    %v455 = vmul.f32 %v359, %v295
    %v456 = vmul.f32 %v363, %v296
    %v457 = vmul.f32 %v367, %v297
    %v458 = vmul.f32 %v371, %v298
    %v459 = vmul.f32 %v375, %v299
    %v460 = vmul.f32 %v379, %v300
    %v461 = vmul.f32 %v383, %v301
    %v462 = vmul.f32 %v387, %v302
    %v463 = vmul.f32 %v391, %v303
    %v464 = vmul.f32 %v395, %v304
    %v465 = vmul.f32 %v399, %v305
    %v466 = vmul.f32 %v403, %v306
    %v467 = vmul.f32 %v407, %v307
    %v468 = vmul.f32 %v411, %v308
    %v469 = vmul.f32 %v415, %v309
    %v470 = vmul.f32 %v419, %v310
    %v471 = vmul.f32 %v423, %v311
    %v472 = vmul.f32 %v427, %v312
    %v473 = vmul.f32 %v431, %v313
    %v474 = vmul.f32 %v435, %v314
    %v475 = vmul.f32 %v439, %v315
    %v476 = vmul.f32 %v443, %v316
    %v477 = vadd.f32 %v252, %v445
    %v478 = vadd.f32 %v253, %v446
    %v479 = vadd.f32 %v254, %v447
    %v480 = vadd.f32 %v255, %v448
    %v481 = vadd.f32 %v256, %v449
    %v482 = vadd.f32 %v257, %v450
    %v483 = vadd.f32 %v258, %v451
    %v484 = vadd.f32 %v259, %v452
    %v485 = vadd.f32 %v260, %v453
    %v486 = vadd.f32 %v261, %v454
    %v487 = vadd.f32 %v262, %v455
    %v488 = vadd.f32 %v263, %v456
    %v489 = vadd.f32 %v264, %v457
    %v490 = vadd.f32 %v265, %v458
    %v491 = vadd.f32 %v266, %v459
    %v492 = vadd.f32 %v267, %v460
    %v493 = vadd.f32 %v268, %v461
    %v494 = vadd.f32 %v269, %v462
    %v495 = vadd.f32 %v270, %v463
    %v496 = vadd.f32 %v271, %v464
    %v497 = vadd.f32 %v272, %v465
    %v498 = vadd.f32 %v273, %v466
    %v499 = vadd.f32 %v274, %v467
    %v500 = vadd.f32 %v275, %v468
    %v501 = vadd.f32 %v276, %v469
    %v502 = vadd.f32 %v277, %v470
    %v503 = vadd.f32 %v278, %v471
    %v504 = vadd.f32 %v279, %v472
    %v505 = vadd.f32 %v280, %v473
    %v506 = vadd.f32 %v281, %v474
    %v507 = vadd.f32 %v282, %v475
    %v508 = vadd.f32 %v283, %v476
    %s509 = scalar_lea.vmem [#allocation2], 512
    %v510 = vld [vmem:[%s509] sm:$0xff]
    %v511 = vld [vmem:[%s509 + $0x8] sm:$0xff]
    %v512 = vld [vmem:[%s509 + $0x10] sm:$0xff]
    %v513 = vld [vmem:[%s509 + $0x18] sm:$0xff]
    %v514 = vld [vmem:[%s509 + $0x20] sm:$0xff]
    %v515 = vld [vmem:[%s509 + $0x28] sm:$0xff]
    %v516 = vld [vmem:[%s509 + $0x30] sm:$0xff]
    %v517 = vld [vmem:[%s509 + $0x38] sm:$0xff]
    %v518 = vld [vmem:[%s509 + $0x40] sm:$0xff]
    %v519 = vld [vmem:[%s509 + $0x48] sm:$0xff]
    %v520 = vld [vmem:[%s509 + $0x50] sm:$0xff]
    %v521 = vld [vmem:[%s509 + $0x58] sm:$0xff]
    %v522 = vld [vmem:[%s509 + $0x60] sm:$0xff]
    %v523 = vld [vmem:[%s509 + $0x68] sm:$0xff]
    %v524 = vld [vmem:[%s509 + $0x70] sm:$0xff]
    %v525 = vld [vmem:[%s509 + $0x78] sm:$0xff]
    %v526 = vld [vmem:[%s509 + $0x80] sm:$0xff]
    %v527 = vld [vmem:[%s509 + $0x88] sm:$0xff]
    %v528 = vld [vmem:[%s509 + $0x90] sm:$0xff]
    %v529 = vld [vmem:[%s509 + $0x98] sm:$0xff]
    %v530 = vld [vmem:[%s509 + $0xa0] sm:$0xff]
    %v531 = vld [vmem:[%s509 + $0xa8] sm:$0xff]
    %v532 = vld [vmem:[%s509 + $0xb0] sm:$0xff]
    %v533 = vld [vmem:[%s509 + $0xb8] sm:$0xff]
    %v534 = vld [vmem:[%s509 + $0xc0] sm:$0xff]
    %v535 = vld [vmem:[%s509 + $0xc8] sm:$0xff]
    %v536 = vld [vmem:[%s509 + $0xd0] sm:$0xff]
    %v537 = vld [vmem:[%s509 + $0xd8] sm:$0xff]
    %v538 = vld [vmem:[%s509 + $0xe0] sm:$0xff]
    %v539 = vld [vmem:[%s509 + $0xe8] sm:$0xff]
    %v540 = vld [vmem:[%s509 + $0xf0] sm:$0xff]
    %v541 = vld [vmem:[%s509 + $0xf8] sm:$0xff]
    %542 = vset.pattern.permute.xlu0 2
    %543 = vperm.xlu0 %542, %v28
    %v544 = vpop.permute.xlu0 %543
    %546 = vset.pattern.permute.xlu0 2
    %547 = vperm.xlu0 %546, %v29
    %v548 = vpop.permute.xlu0 %547
    %550 = vset.pattern.permute.xlu0 2
    %551 = vperm.xlu0 %550, %v30
    %v552 = vpop.permute.xlu0 %551
    %554 = vset.pattern.permute.xlu0 2
    %555 = vperm.xlu0 %554, %v31
    %v556 = vpop.permute.xlu0 %555
    %558 = vset.pattern.permute.xlu0 2
    %559 = vperm.xlu0 %558, %v32
    %v560 = vpop.permute.xlu0 %559
    %562 = vset.pattern.permute.xlu0 2
    %563 = vperm.xlu0 %562, %v33
    %v564 = vpop.permute.xlu0 %563
    %566 = vset.pattern.permute.xlu0 2
    %567 = vperm.xlu0 %566, %v34
    %v568 = vpop.permute.xlu0 %567
    %570 = vset.pattern.permute.xlu0 2
    %571 = vperm.xlu0 %570, %v35
    %v572 = vpop.permute.xlu0 %571
    %574 = vset.pattern.permute.xlu0 2
    %575 = vperm.xlu0 %574, %v36
    %v576 = vpop.permute.xlu0 %575
    %578 = vset.pattern.permute.xlu0 2
    %579 = vperm.xlu0 %578, %v37
    %v580 = vpop.permute.xlu0 %579
    %582 = vset.pattern.permute.xlu0 2
    %583 = vperm.xlu0 %582, %v38
    %v584 = vpop.permute.xlu0 %583
    %586 = vset.pattern.permute.xlu0 2
    %587 = vperm.xlu0 %586, %v39
    %v588 = vpop.permute.xlu0 %587
    %590 = vset.pattern.permute.xlu0 2
    %591 = vperm.xlu0 %590, %v40
    %v592 = vpop.permute.xlu0 %591
    %594 = vset.pattern.permute.xlu0 2
    %595 = vperm.xlu0 %594, %v41
    %v596 = vpop.permute.xlu0 %595
    %598 = vset.pattern.permute.xlu0 2
    %599 = vperm.xlu0 %598, %v42
    %v600 = vpop.permute.xlu0 %599
    %602 = vset.pattern.permute.xlu0 2
    %603 = vperm.xlu0 %602, %v43
    %v604 = vpop.permute.xlu0 %603
    %606 = vset.pattern.permute.xlu0 2
    %607 = vperm.xlu0 %606, %v44
    %v608 = vpop.permute.xlu0 %607
    %610 = vset.pattern.permute.xlu0 2
    %611 = vperm.xlu0 %610, %v45
    %v612 = vpop.permute.xlu0 %611
    %614 = vset.pattern.permute.xlu0 2
    %615 = vperm.xlu0 %614, %v46
    %v616 = vpop.permute.xlu0 %615
    %618 = vset.pattern.permute.xlu0 2
    %619 = vperm.xlu0 %618, %v47
    %v620 = vpop.permute.xlu0 %619
    %622 = vset.pattern.permute.xlu0 2
    %623 = vperm.xlu0 %622, %v48
    %v624 = vpop.permute.xlu0 %623
    %626 = vset.pattern.permute.xlu0 2
    %627 = vperm.xlu0 %626, %v49
    %v628 = vpop.permute.xlu0 %627
    %630 = vset.pattern.permute.xlu0 2
    %631 = vperm.xlu0 %630, %v50
    %v632 = vpop.permute.xlu0 %631
    %634 = vset.pattern.permute.xlu0 2
    %635 = vperm.xlu0 %634, %v51
    %v636 = vpop.permute.xlu0 %635
    %638 = vset.pattern.permute.xlu0 2
    %639 = vperm.xlu0 %638, %v52
    %v640 = vpop.permute.xlu0 %639
    %642 = vset.pattern.permute.xlu0 2
    %643 = vperm.xlu0 %642, %v53
    %v644 = vpop.permute.xlu0 %643
    %646 = vset.pattern.permute.xlu0 2
    %647 = vperm.xlu0 %646, %v54
    %v648 = vpop.permute.xlu0 %647
    %650 = vset.pattern.permute.xlu0 2
    %651 = vperm.xlu0 %650, %v55
    %v652 = vpop.permute.xlu0 %651
    %654 = vset.pattern.permute.xlu0 2
    %655 = vperm.xlu0 %654, %v56
    %v656 = vpop.permute.xlu0 %655
    %658 = vset.pattern.permute.xlu0 2
    %659 = vperm.xlu0 %658, %v57
    %v660 = vpop.permute.xlu0 %659
    %662 = vset.pattern.permute.xlu0 2
    %663 = vperm.xlu0 %662, %v58
    %v664 = vpop.permute.xlu0 %663
    %666 = vset.pattern.permute.xlu0 2
    %667 = vperm.xlu0 %666, %v59
    %v668 = vpop.permute.xlu0 %667
    %v670 = vmul.f32 %v544, %v510
    %v671 = vmul.f32 %v548, %v511
    %v672 = vmul.f32 %v552, %v512
    %v673 = vmul.f32 %v556, %v513
    %v674 = vmul.f32 %v560, %v514
    %v675 = vmul.f32 %v564, %v515
    %v676 = vmul.f32 %v568, %v516
    %v677 = vmul.f32 %v572, %v517
    %v678 = vmul.f32 %v576, %v518
    %v679 = vmul.f32 %v580, %v519
    %v680 = vmul.f32 %v584, %v520
    %v681 = vmul.f32 %v588, %v521
    %v682 = vmul.f32 %v592, %v522
    %v683 = vmul.f32 %v596, %v523
    %v684 = vmul.f32 %v600, %v524
    %v685 = vmul.f32 %v604, %v525
    %v686 = vmul.f32 %v608, %v526
    %v687 = vmul.f32 %v612, %v527
    %v688 = vmul.f32 %v616, %v528
    %v689 = vmul.f32 %v620, %v529
    %v690 = vmul.f32 %v624, %v530
    %v691 = vmul.f32 %v628, %v531
    %v692 = vmul.f32 %v632, %v532
    %v693 = vmul.f32 %v636, %v533
    %v694 = vmul.f32 %v640, %v534
    %v695 = vmul.f32 %v644, %v535
    %v696 = vmul.f32 %v648, %v536
    %v697 = vmul.f32 %v652, %v537
    %v698 = vmul.f32 %v656, %v538
    %v699 = vmul.f32 %v660, %v539
    %v700 = vmul.f32 %v664, %v540
    %v701 = vmul.f32 %v668, %v541
    %v702 = vadd.f32 %v477, %v670
    %v703 = vadd.f32 %v478, %v671
    %v704 = vadd.f32 %v479, %v672
    %v705 = vadd.f32 %v480, %v673
    %v706 = vadd.f32 %v481, %v674
    %v707 = vadd.f32 %v482, %v675
    %v708 = vadd.f32 %v483, %v676
    %v709 = vadd.f32 %v484, %v677
    %v710 = vadd.f32 %v485, %v678
    %v711 = vadd.f32 %v486, %v679
    %v712 = vadd.f32 %v487, %v680
    %v713 = vadd.f32 %v488, %v681
    %v714 = vadd.f32 %v489, %v682
    %v715 = vadd.f32 %v490, %v683
    %v716 = vadd.f32 %v491, %v684
    %v717 = vadd.f32 %v492, %v685
    %v718 = vadd.f32 %v493, %v686
    %v719 = vadd.f32 %v494, %v687
    %v720 = vadd.f32 %v495, %v688
    %v721 = vadd.f32 %v496, %v689
    %v722 = vadd.f32 %v497, %v690
    %v723 = vadd.f32 %v498, %v691
    %v724 = vadd.f32 %v499, %v692
    %v725 = vadd.f32 %v500, %v693
    %v726 = vadd.f32 %v501, %v694
    %v727 = vadd.f32 %v502, %v695
    %v728 = vadd.f32 %v503, %v696
    %v729 = vadd.f32 %v504, %v697
    %v730 = vadd.f32 %v505, %v698
    %v731 = vadd.f32 %v506, %v699
    %v732 = vadd.f32 %v507, %v700
    %v733 = vadd.f32 %v508, %v701
    %s734 = scalar_lea.vmem [#allocation2], 768
    %v735 = vld [vmem:[%s734] sm:$0xff]
    %v736 = vld [vmem:[%s734 + $0x8] sm:$0xff]
    %v737 = vld [vmem:[%s734 + $0x10] sm:$0xff]
    %v738 = vld [vmem:[%s734 + $0x18] sm:$0xff]
    %v739 = vld [vmem:[%s734 + $0x20] sm:$0xff]
    %v740 = vld [vmem:[%s734 + $0x28] sm:$0xff]
    %v741 = vld [vmem:[%s734 + $0x30] sm:$0xff]
    %v742 = vld [vmem:[%s734 + $0x38] sm:$0xff]
    %v743 = vld [vmem:[%s734 + $0x40] sm:$0xff]
    %v744 = vld [vmem:[%s734 + $0x48] sm:$0xff]
    %v745 = vld [vmem:[%s734 + $0x50] sm:$0xff]
    %v746 = vld [vmem:[%s734 + $0x58] sm:$0xff]
    %v747 = vld [vmem:[%s734 + $0x60] sm:$0xff]
    %v748 = vld [vmem:[%s734 + $0x68] sm:$0xff]
    %v749 = vld [vmem:[%s734 + $0x70] sm:$0xff]
    %v750 = vld [vmem:[%s734 + $0x78] sm:$0xff]
    %v751 = vld [vmem:[%s734 + $0x80] sm:$0xff]
    %v752 = vld [vmem:[%s734 + $0x88] sm:$0xff]
    %v753 = vld [vmem:[%s734 + $0x90] sm:$0xff]
    %v754 = vld [vmem:[%s734 + $0x98] sm:$0xff]
    %v755 = vld [vmem:[%s734 + $0xa0] sm:$0xff]
    %v756 = vld [vmem:[%s734 + $0xa8] sm:$0xff]
    %v757 = vld [vmem:[%s734 + $0xb0] sm:$0xff]
    %v758 = vld [vmem:[%s734 + $0xb8] sm:$0xff]
    %v759 = vld [vmem:[%s734 + $0xc0] sm:$0xff]
    %v760 = vld [vmem:[%s734 + $0xc8] sm:$0xff]
    %v761 = vld [vmem:[%s734 + $0xd0] sm:$0xff]
    %v762 = vld [vmem:[%s734 + $0xd8] sm:$0xff]
    %v763 = vld [vmem:[%s734 + $0xe0] sm:$0xff]
    %v764 = vld [vmem:[%s734 + $0xe8] sm:$0xff]
    %v765 = vld [vmem:[%s734 + $0xf0] sm:$0xff]
    %v766 = vld [vmem:[%s734 + $0xf8] sm:$0xff]
    %767 = vset.pattern.permute.xlu0 3
    %768 = vperm.xlu0 %767, %v28
    %v769 = vpop.permute.xlu0 %768
    %771 = vset.pattern.permute.xlu0 3
    %772 = vperm.xlu0 %771, %v29
    %v773 = vpop.permute.xlu0 %772
    %775 = vset.pattern.permute.xlu0 3
    %776 = vperm.xlu0 %775, %v30
    %v777 = vpop.permute.xlu0 %776
    %779 = vset.pattern.permute.xlu0 3
    %780 = vperm.xlu0 %779, %v31
    %v781 = vpop.permute.xlu0 %780
    %783 = vset.pattern.permute.xlu0 3
    %784 = vperm.xlu0 %783, %v32
    %v785 = vpop.permute.xlu0 %784
    %787 = vset.pattern.permute.xlu0 3
    %788 = vperm.xlu0 %787, %v33
    %v789 = vpop.permute.xlu0 %788
    %791 = vset.pattern.permute.xlu0 3
    %792 = vperm.xlu0 %791, %v34
    %v793 = vpop.permute.xlu0 %792
    %795 = vset.pattern.permute.xlu0 3
    %796 = vperm.xlu0 %795, %v35
    %v797 = vpop.permute.xlu0 %796
    %799 = vset.pattern.permute.xlu0 3
    %800 = vperm.xlu0 %799, %v36
    %v801 = vpop.permute.xlu0 %800
    %803 = vset.pattern.permute.xlu0 3
    %804 = vperm.xlu0 %803, %v37
    %v805 = vpop.permute.xlu0 %804
    %807 = vset.pattern.permute.xlu0 3
    %808 = vperm.xlu0 %807, %v38
    %v809 = vpop.permute.xlu0 %808
    %811 = vset.pattern.permute.xlu0 3
    %812 = vperm.xlu0 %811, %v39
    %v813 = vpop.permute.xlu0 %812
    %815 = vset.pattern.permute.xlu0 3
    %816 = vperm.xlu0 %815, %v40
    %v817 = vpop.permute.xlu0 %816
    %819 = vset.pattern.permute.xlu0 3
    %820 = vperm.xlu0 %819, %v41
    %v821 = vpop.permute.xlu0 %820
    %823 = vset.pattern.permute.xlu0 3
    %824 = vperm.xlu0 %823, %v42
    %v825 = vpop.permute.xlu0 %824
    %827 = vset.pattern.permute.xlu0 3
    %828 = vperm.xlu0 %827, %v43
    %v829 = vpop.permute.xlu0 %828
    %831 = vset.pattern.permute.xlu0 3
    %832 = vperm.xlu0 %831, %v44
    %v833 = vpop.permute.xlu0 %832
    %835 = vset.pattern.permute.xlu0 3
    %836 = vperm.xlu0 %835, %v45
    %v837 = vpop.permute.xlu0 %836
    %839 = vset.pattern.permute.xlu0 3
    %840 = vperm.xlu0 %839, %v46
    %v841 = vpop.permute.xlu0 %840
    %843 = vset.pattern.permute.xlu0 3
    %844 = vperm.xlu0 %843, %v47
    %v845 = vpop.permute.xlu0 %844
    %847 = vset.pattern.permute.xlu0 3
    %848 = vperm.xlu0 %847, %v48
    %v849 = vpop.permute.xlu0 %848
    %851 = vset.pattern.permute.xlu0 3
    %852 = vperm.xlu0 %851, %v49
    %v853 = vpop.permute.xlu0 %852
    %855 = vset.pattern.permute.xlu0 3
    %856 = vperm.xlu0 %855, %v50
    %v857 = vpop.permute.xlu0 %856
    %859 = vset.pattern.permute.xlu0 3
    %860 = vperm.xlu0 %859, %v51
    %v861 = vpop.permute.xlu0 %860
    %863 = vset.pattern.permute.xlu0 3
    %864 = vperm.xlu0 %863, %v52
    %v865 = vpop.permute.xlu0 %864
    %867 = vset.pattern.permute.xlu0 3
    %868 = vperm.xlu0 %867, %v53
    %v869 = vpop.permute.xlu0 %868
    %871 = vset.pattern.permute.xlu0 3
    %872 = vperm.xlu0 %871, %v54
    %v873 = vpop.permute.xlu0 %872
    %875 = vset.pattern.permute.xlu0 3
    %876 = vperm.xlu0 %875, %v55
    %v877 = vpop.permute.xlu0 %876
    %879 = vset.pattern.permute.xlu0 3
    %880 = vperm.xlu0 %879, %v56
    %v881 = vpop.permute.xlu0 %880
    %883 = vset.pattern.permute.xlu0 3
    %884 = vperm.xlu0 %883, %v57
    %v885 = vpop.permute.xlu0 %884
    %887 = vset.pattern.permute.xlu0 3
    %888 = vperm.xlu0 %887, %v58
    %v889 = vpop.permute.xlu0 %888
    %891 = vset.pattern.permute.xlu0 3
    %892 = vperm.xlu0 %891, %v59
    %v893 = vpop.permute.xlu0 %892
    %v895 = vmul.f32 %v769, %v735
    %v896 = vmul.f32 %v773, %v736
    %v897 = vmul.f32 %v777, %v737
    %v898 = vmul.f32 %v781, %v738
    %v899 = vmul.f32 %v785, %v739
    %v900 = vmul.f32 %v789, %v740
    %v901 = vmul.f32 %v793, %v741
    %v902 = vmul.f32 %v797, %v742
    %v903 = vmul.f32 %v801, %v743
    %v904 = vmul.f32 %v805, %v744
    %v905 = vmul.f32 %v809, %v745
    %v906 = vmul.f32 %v813, %v746
    %v907 = vmul.f32 %v817, %v747
    %v908 = vmul.f32 %v821, %v748
    %v909 = vmul.f32 %v825, %v749
    %v910 = vmul.f32 %v829, %v750
    %v911 = vmul.f32 %v833, %v751
    %v912 = vmul.f32 %v837, %v752
    %v913 = vmul.f32 %v841, %v753
    %v914 = vmul.f32 %v845, %v754
    %v915 = vmul.f32 %v849, %v755
    %v916 = vmul.f32 %v853, %v756
    %v917 = vmul.f32 %v857, %v757
    %v918 = vmul.f32 %v861, %v758
    %v919 = vmul.f32 %v865, %v759
    %v920 = vmul.f32 %v869, %v760
    %v921 = vmul.f32 %v873, %v761
    %v922 = vmul.f32 %v877, %v762
    %v923 = vmul.f32 %v881, %v763
    %v924 = vmul.f32 %v885, %v764
    %v925 = vmul.f32 %v889, %v765
    %v926 = vmul.f32 %v893, %v766
    %v927 = vadd.f32 %v702, %v895
    %v928 = vadd.f32 %v703, %v896
    %v929 = vadd.f32 %v704, %v897
    %v930 = vadd.f32 %v705, %v898
    %v931 = vadd.f32 %v706, %v899
    %v932 = vadd.f32 %v707, %v900
    %v933 = vadd.f32 %v708, %v901
    %v934 = vadd.f32 %v709, %v902
    %v935 = vadd.f32 %v710, %v903
    %v936 = vadd.f32 %v711, %v904
    %v937 = vadd.f32 %v712, %v905
    %v938 = vadd.f32 %v713, %v906
    %v939 = vadd.f32 %v714, %v907
    %v940 = vadd.f32 %v715, %v908
    %v941 = vadd.f32 %v716, %v909
    %v942 = vadd.f32 %v717, %v910
    %v943 = vadd.f32 %v718, %v911
    %v944 = vadd.f32 %v719, %v912
    %v945 = vadd.f32 %v720, %v913
    %v946 = vadd.f32 %v721, %v914
    %v947 = vadd.f32 %v722, %v915
    %v948 = vadd.f32 %v723, %v916
    %v949 = vadd.f32 %v724, %v917
    %v950 = vadd.f32 %v725, %v918
    %v951 = vadd.f32 %v726, %v919
    %v952 = vadd.f32 %v727, %v920
    %v953 = vadd.f32 %v728, %v921
    %v954 = vadd.f32 %v729, %v922
    %v955 = vadd.f32 %v730, %v923
    %v956 = vadd.f32 %v731, %v924
    %v957 = vadd.f32 %v732, %v925
    %v958 = vadd.f32 %v733, %v926
    %959 = vst [vmem:[#allocation5] sm:$0xff] %v927
    %960 = vst [vmem:[#allocation5 + $0x8] sm:$0xff] %v928
    %961 = vst [vmem:[#allocation5 + $0x10] sm:$0xff] %v929
    %962 = vst [vmem:[#allocation5 + $0x18] sm:$0xff] %v930
    %963 = vst [vmem:[#allocation5 + $0x20] sm:$0xff] %v931
    %964 = vst [vmem:[#allocation5 + $0x28] sm:$0xff] %v932
    %965 = vst [vmem:[#allocation5 + $0x30] sm:$0xff] %v933
    %966 = vst [vmem:[#allocation5 + $0x38] sm:$0xff] %v934
    %967 = vst [vmem:[#allocation5 + $0x40] sm:$0xff] %v935
    %968 = vst [vmem:[#allocation5 + $0x48] sm:$0xff] %v936
    %969 = vst [vmem:[#allocation5 + $0x50] sm:$0xff] %v937
    %970 = vst [vmem:[#allocation5 + $0x58] sm:$0xff] %v938
    %971 = vst [vmem:[#allocation5 + $0x60] sm:$0xff] %v939
    %972 = vst [vmem:[#allocation5 + $0x68] sm:$0xff] %v940
    %973 = vst [vmem:[#allocation5 + $0x70] sm:$0xff] %v941
    %974 = vst [vmem:[#allocation5 + $0x78] sm:$0xff] %v942
    %975 = vst [vmem:[#allocation5 + $0x80] sm:$0xff] %v943
    %976 = vst [vmem:[#allocation5 + $0x88] sm:$0xff] %v944
    %977 = vst [vmem:[#allocation5 + $0x90] sm:$0xff] %v945
    %978 = vst [vmem:[#allocation5 + $0x98] sm:$0xff] %v946
    %979 = vst [vmem:[#allocation5 + $0xa0] sm:$0xff] %v947
    %980 = vst [vmem:[#allocation5 + $0xa8] sm:$0xff] %v948
    %981 = vst [vmem:[#allocation5 + $0xb0] sm:$0xff] %v949
    %982 = vst [vmem:[#allocation5 + $0xb8] sm:$0xff] %v950
    %983 = vst [vmem:[#allocation5 + $0xc0] sm:$0xff] %v951
    %984 = vst [vmem:[#allocation5 + $0xc8] sm:$0xff] %v952
    %985 = vst [vmem:[#allocation5 + $0xd0] sm:$0xff] %v953
    %986 = vst [vmem:[#allocation5 + $0xd8] sm:$0xff] %v954
    %987 = vst [vmem:[#allocation5 + $0xe0] sm:$0xff] %v955
    %988 = vst [vmem:[#allocation5 + $0xe8] sm:$0xff] %v956
    %989 = vst [vmem:[#allocation5 + $0xf0] sm:$0xff] %v957
    %990 = vst [vmem:[#allocation5 + $0xf8] sm:$0xff] %v958
    // Predicated region
    $region14: #{tpu_custom_call.1} parent=1 // pred_check
      _
    $region15: #{tpu_custom_call.1} parent=1 // pred_check_branch
      %992 = sbr.rel (0) target = $region17
    $region16: #{tpu_custom_call.1} parent=1 // pred_region
      %994 = vsyncadd [#allocation4], 0
      %s995 = sshll.u32 [#allocation5], 4
      %s996 = int_to_ptr.vmem [resolvable:$true] %s995
      %s997 = sshll.u32 %s2, 4
      %s998 = int_to_ptr.hbm [resolvable:$true] %s997
      %1003 = dma.vmem_to_hbm [thread:$0]  %s996, 4096, %s998, [#allocation4], 128, 128, 8
    $region17: #{tpu_custom_call.1} parent=1 // pred_fallthru
      _
    // Predicated region
    $region18: #{tpu_custom_call.1} parent=1 // pred_check
      _
    $region19: #{tpu_custom_call.1} parent=1 // pred_check_branch
      %1005 = sbr.rel (0) target = $region21
    $region20: #{tpu_custom_call.1} parent=1 // pred_region
      %1007 = dma.done [#allocation4], 4096
    $region21: #{tpu_custom_call.1} parent=1 // pred_fallthru
      _
    %1008 = vsyncpa [#allocation3], 1
    %1009 = vsyncpa [#allocation4], 1

</llo_original>
